<compile_context>
chip_gen: v6e
topology: v6e:2x2x1
jax: 0.10.0
libtpu: 0.0.40
codegen_flags: <defaults>
</compile_context>

<pallas_src>
import functools

import jax
import jax.numpy as jnp
from jax.experimental import pallas as pl
from jax.experimental.pallas import tpu as pltpu


def _round_up(x, m):
    return ((x + m - 1) // m) * m


def _sage_kernel(a_ref, xsrc_ref, xdst_ref, wneigh_ref, wself_ref, b_ref,
                 o_ref, acc_ref, *, reduce):
    k = pl.program_id(2)

    @pl.when(k == 0)
    def _init():
        acc_ref[...] = jnp.zeros_like(acc_ref)

    # Neighbor aggregation: (tm, tk) bf16 @ (tk, Fa) bf16 -> f32 accumulate on the MXU.
    acc_ref[...] += jnp.dot(a_ref[...], xsrc_ref[...],
                            preferred_element_type=jnp.float32)

    @pl.when(k == pl.num_programs(2) - 1)
    def _finalize():
        acc = acc_ref[...]                                  # (tm, Fa) f32
        if reduce == "mean":
            # Last feature column is all-ones, so its accumulator column is the
            # in-degree (exact: integer sums in f32).
            deg = jnp.maximum(acc[:, acc.shape[-1] - 1:], 1.0)
            acc = acc * pl.reciprocal(deg, approx=False)
        out = jnp.dot(acc, wneigh_ref[...], preferred_element_type=jnp.float32)
        out += jnp.dot(xdst_ref[...].astype(jnp.float32), wself_ref[...],
                       preferred_element_type=jnp.float32)
        out += b_ref[...]
        o_ref[...] = out.astype(o_ref.dtype)


def sage_stage_forward(blocks, feats, w_self, w_neigh, bias, *, reduce="mean",
                       tm_max=256, tk_max=512):
    """Apply one shared SAGEConv to every (block, feat) pair in a single Pallas call."""
    if reduce not in ("mean", "sum"):
        # TODO(synk): 'max'/'min' reducers need masked segment reductions, not a dense matmul.
        raise NotImplementedError(f"reduce={reduce!r} not implemented in the Pallas kernel")

    n = len(blocks)
    dsts = [int(b.shape[0]) for b in blocks]
    srcs = [int(b.shape[1]) for b in blocks]
    for i in range(n):
        assert srcs[i] == int(feats[i].shape[0]), (
            "number of nodes {} is not equal to the number of features {}!".format(
                srcs[i], feats[i].shape[0]))
        assert srcs[i] >= dsts[i], "DGL block convention requires num_src >= num_dst"

    F = int(feats[0].shape[1])
    H = int(w_self.shape[1])
    with_ones = reduce == "mean"
    Fa = F + 1 if with_ones else F

    # Tile sizes: M (dst rows) multiple of 8, K (src nodes) multiple of 128
    # (tm_max/tk_max are 256-aligned for v6e/v7x MXUs, 128-aligned for v5e).
    Dmax, Smax = max(dsts), max(srcs)
    tm = tm_max if Dmax >= tm_max else _round_up(Dmax, 8)
    tk = tk_max if Smax >= tk_max else _round_up(Smax, 128)
    Dp = _round_up(Dmax, tm)
    Sp = _round_up(Smax, tk)
    rows = max(Sp, Dp)            # feature rows must cover both K tiles and dst (M) tiles
    Hp = _round_up(H, 128)        # lane-dense output stores

    # Stack + zero-pad all workers (bf16: 0/1 adjacency values are exact).
    adj_b = jnp.zeros((n, Dp, Sp), jnp.bfloat16)
    feat_b = jnp.zeros((n, rows, Fa), jnp.bfloat16)
    for i in range(n):
        adj_b = adj_b.at[i, :dsts[i], :srcs[i]].set(blocks[i].astype(jnp.bfloat16))
        feat_b = feat_b.at[i, :srcs[i], :F].set(feats[i].astype(jnp.bfloat16))
    if with_ones:
        feat_b = feat_b.at[:, :, F].set(1.0)   # degree column (padded A cols are 0 anyway)

    # Weights padded with a zero row for the ones-column and zero columns out to Hp.
    wz = jnp.zeros((Fa, Hp), jnp.float32)
    w_self_p = wz.at[:F, :H].set(w_self.astype(jnp.float32))
    w_neigh_p = wz.at[:F, :H].set(w_neigh.astype(jnp.float32))
    bias_p = jnp.zeros((1, Hp), jnp.float32).at[0, :H].set(bias.astype(jnp.float32))

    grid = (n, Dp // tm, Sp // tk)
    kernel = functools.partial(_sage_kernel, reduce=reduce)

    flops = int(2 * n * (Dp * Sp * Fa + 2 * Dp * Fa * Hp))
    bytes_accessed = int(adj_b.size * 2 + 2 * feat_b.size * 2 +
                         (w_self_p.size + w_neigh_p.size + bias_p.size) * 4 +
                         n * Dp * Hp * 4)

    # TODO(synk): if n_hidden < in_feats (rare after the model-parallel feature split),
    # the algebraically reordered A @ (X @ W_neigh) form would be cheaper; not implemented.
    out = pl.pallas_call(
        kernel,
        out_shape=jax.ShapeDtypeStruct((n, Dp, Hp), jnp.float32),
        grid_spec=pltpu.PrefetchScalarGridSpec(
            num_scalar_prefetch=0,
            grid=grid,
            in_specs=[
                # adjacency tile (tm, tk)
                pl.BlockSpec((pl.Squeezed(), tm, tk), lambda w, i, k: (w, i, k)),
                # src-feature tile (tk, Fa) -- K-tiled view of the feature array
                pl.BlockSpec((pl.Squeezed(), tk, Fa), lambda w, i, k: (w, k, 0)),
                # dst-feature tile (tm, Fa) -- same array, M-tiled view (no HBM copy)
                pl.BlockSpec((pl.Squeezed(), tm, Fa), lambda w, i, k: (w, i, 0)),
                # shared weights / bias, resident across the whole grid
                pl.BlockSpec((Fa, Hp), lambda w, i, k: (0, 0)),
                pl.BlockSpec((Fa, Hp), lambda w, i, k: (0, 0)),
                pl.BlockSpec((1, Hp), lambda w, i, k: (0, 0)),
            ],
            out_specs=pl.BlockSpec((pl.Squeezed(), tm, Hp), lambda w, i, k: (w, i, 0)),
            scratch_shapes=[pltpu.VMEM((tm, Fa), jnp.float32)],
        ),
        compiler_params=pltpu.CompilerParams(
            dimension_semantics=("parallel", "parallel", "arbitrary")),
        cost_estimate=pl.CostEstimate(flops=flops, transcendentals=0,
                                      bytes_accessed=bytes_accessed),
    )(adj_b, feat_b, feat_b, w_neigh_p, w_self_p, bias_p)

    return [out[i, :dsts[i], :H] for i in range(n)]


class ModelParallelStage:
    """Pallas port of the model-parallel stage: one shared SAGEConv applied per worker.
    No activation is applied (per the original docstring)."""

    def __init__(self, in_feats, n_hidden, n_workers, reduce="mean", *, key):
        self.n_workers = n_workers
        self.reduce = reduce
        k_self, k_neigh = jax.random.split(key)
        bound = (6.0 / (in_feats + n_hidden)) ** 0.5  # Xavier-uniform (DGL default)
        self.w_self = jax.random.uniform(k_self, (in_feats, n_hidden), jnp.float32, -bound, bound)
        self.w_neigh = jax.random.uniform(k_neigh, (in_feats, n_hidden), jnp.float32, -bound, bound)
        self.bias = jnp.zeros((n_hidden,), jnp.float32)

    def __call__(self, blocks, feats):
        for i in range(self.n_workers):
            assert blocks[i].shape[1] == feats[i].shape[0], (
                "number of nodes {} is not equal to the number of features {}!".format(
                    blocks[i].shape[1], feats[i].shape[0]))
        return sage_stage_forward(
            list(blocks[: self.n_workers]), list(feats[: self.n_workers]),
            self.w_self, self.w_neigh, self.bias, reduce=self.reduce)


def _sage_conv_ref(adj, feat, w_self, w_neigh, bias, reduce="mean"):
    """Pure-JAX reference, using the same bf16-rounded inputs as the kernel."""
    a = adj.astype(jnp.bfloat16).astype(jnp.float32)
    x = feat.astype(jnp.bfloat16).astype(jnp.float32)
    num_dst = adj.shape[0]
    agg = a @ x
    if reduce == "mean":
        deg = jnp.clip(a.sum(-1, keepdims=True), 1.0, None)
        agg = agg / deg
    return agg @ w_neigh + x[:num_dst] @ w_self + bias[None, :]


if __name__ == "__main__":
    key = jax.random.PRNGKey(0)
    n_workers = 2
    in_feats = 16      # already-split feature dim (model parallel)
    n_hidden = 32
    sizes = [(32, 64), (24, 48)]   # (num_dst, num_src) per worker (exercises padding)

    k_model, k_graph, k_feat = jax.random.split(key, 3)
    stage = ModelParallelStage(in_feats, n_hidden, n_workers, reduce="mean", key=k_model)

    blocks, feats = [], []
    for i, (d, s) in enumerate(sizes):
        kg, kf = jax.random.fold_in(k_graph, i), jax.random.fold_in(k_feat, i)
        adj = jax.random.bernoulli(kg, p=0.3, shape=(d, s)).astype(jnp.float32)
        x = jax.random.normal(kf, (s, in_feats), jnp.float32)
        blocks.append(adj)
        feats.append(x)

    outs = stage(blocks, feats)
    outs = [jax.block_until_ready(o) for o in outs]

    for i, (d, s) in enumerate(sizes):
        ref = _sage_conv_ref(blocks[i], feats[i], stage.w_self, stage.w_neigh,
                             stage.bias, reduce="mean")
        assert outs[i].shape == (d, n_hidden), outs[i].shape
        assert jnp.allclose(outs[i], ref, atol=2e-4, rtol=2e-4), (
            f"worker {i}: max abs err {jnp.max(jnp.abs(outs[i] - ref))}")

    print("KERNEL_OK")
</pallas_src>

<mosaic_0001>
module attributes {stable_mosaic.version = 11 : i64} {
  func.func @_sage_kernel(%arg0: i32, %arg1: i32, %arg2: i32, %arg3: memref<1x32x128xbf16, #tpu.memory_space<vmem>>, %arg4: memref<1x128x17xbf16, #tpu.memory_space<vmem>>, %arg5: memref<1x32x17xbf16, #tpu.memory_space<vmem>>, %arg6: memref<17x128xf32, #tpu.memory_space<vmem>>, %arg7: memref<17x128xf32, #tpu.memory_space<vmem>>, %arg8: memref<1x128xf32, #tpu.memory_space<vmem>>, %arg9: memref<1x32x128xf32, #tpu.memory_space<vmem>>, %arg10: memref<32x17xf32, #tpu.memory_space<vmem>>) attributes {dimension_semantics = [#tpu.dimension_semantics<parallel>, #tpu.dimension_semantics<parallel>, #tpu.dimension_semantics<arbitrary>], iteration_bounds = array<i64: 2, 1, 1>, scalar_prefetch = 0 : i64, scratch_operands = 1 : i64, tpu.core_type = #tpu.core_type<tc>, window_params = [{transform_indices = @transform_0, window_bounds = array<i64: 1, 32, 128>}, {transform_indices = @transform_1, window_bounds = array<i64: 1, 128, 17>}, {transform_indices = @transform_2, window_bounds = array<i64: 1, 32, 17>}, {pipeline_mode = #tpu.pipeline_mode<synchronous>, transform_indices = @transform_3, window_bounds = array<i64: 17, 128>}, {pipeline_mode = #tpu.pipeline_mode<synchronous>, transform_indices = @transform_4, window_bounds = array<i64: 17, 128>}, {pipeline_mode = #tpu.pipeline_mode<synchronous>, transform_indices = @transform_5, window_bounds = array<i64: 1, 128>}, {transform_indices = @transform_6, window_bounds = array<i64: 1, 32, 128>}]} {
    %c0_i32 = arith.constant 0 : i32
    %0 = arith.cmpi eq, %arg2, %c0_i32 : i32
    %1 = arith.extui %0 : i1 to i32
    %c0_i32_0 = arith.constant 0 : i32
    %2 = arith.cmpi ne, %1, %c0_i32_0 : i32
    scf.if %2 {
      %cst_12 = arith.constant 0.000000e+00 : f32
      %14 = vector.broadcast %cst_12 : f32 to vector<32x17xf32>
      %c0_13 = arith.constant 0 : index
      %c0_14 = arith.constant 0 : index
      %15 = vector.load %arg10[%c0_13, %c0_14] : memref<32x17xf32, #tpu.memory_space<vmem>>, vector<32x17xf32>
      tpu.vector_store %arg10[%c0_13, %c0_14], %14 {strides = array<i32>} : memref<32x17xf32, #tpu.memory_space<vmem>>, vector<32x17xf32>,
    } else {
    }
    %c0 = arith.constant 0 : index
    %c0_1 = arith.constant 0 : index
    %3 = vector.load %arg10[%c0, %c0_1] : memref<32x17xf32, #tpu.memory_space<vmem>>, vector<32x17xf32>
    %c0_2 = arith.constant 0 : index
    %c0_3 = arith.constant 0 : index
    %c0_4 = arith.constant 0 : index
    %4 = vector.load %arg3[%c0_2, %c0_3, %c0_4] : memref<1x32x128xbf16, #tpu.memory_space<vmem>>, vector<1x32x128xbf16>
    %5 = vector.shape_cast %4 : vector<1x32x128xbf16> to vector<32x128xbf16>
    %c0_5 = arith.constant 0 : index
    %c0_6 = arith.constant 0 : index
    %c0_7 = arith.constant 0 : index
    %6 = vector.load %arg4[%c0_5, %c0_6, %c0_7] : memref<1x128x17xbf16, #tpu.memory_space<vmem>>, vector<1x128x17xbf16>
    %7 = vector.shape_cast %6 : vector<1x128x17xbf16> to vector<128x17xbf16>
    %cst = arith.constant dense<0.000000e+00> : vector<32x17xf32>
    %8 = tpu.matmul %5, %7, %cst {dimension_numbers = #tpu.dot_dimension_numbers<[1], [0], [0], [1], [0, 0, 1, 1], [], []>} : vector<32x128xbf16>, vector<128x17xbf16>, vector<32x17xf32> -> vector<32x17xf32>
    %9 = arith.addf %3, %8 : vector<32x17xf32>
    %c0_8 = arith.constant 0 : index
    %c0_9 = arith.constant 0 : index
    %10 = vector.load %arg10[%c0_8, %c0_9] : memref<32x17xf32, #tpu.memory_space<vmem>>, vector<32x17xf32>
    tpu.vector_store %arg10[%c0_8, %c0_9], %9 {strides = array<i32>} : memref<32x17xf32, #tpu.memory_space<vmem>>, vector<32x17xf32>,
    %c0_i32_10 = arith.constant 0 : i32
    %11 = arith.cmpi eq, %arg2, %c0_i32_10 : i32
    %12 = arith.extui %11 : i1 to i32
    %c0_i32_11 = arith.constant 0 : i32
    %13 = arith.cmpi ne, %12, %c0_i32_11 : i32
    scf.if %13 {
      %c0_12 = arith.constant 0 : index
      %c0_13 = arith.constant 0 : index
      %14 = vector.load %arg10[%c0_12, %c0_13] : memref<32x17xf32, #tpu.memory_space<vmem>>, vector<32x17xf32>
      %15 = vector.extract_strided_slice %14 {offsets = [0, 16], sizes = [32, 1], strides = [1, 1]} : vector<32x17xf32> to vector<32x1xf32>
      %cst_14 = arith.constant 1.000000e+00 : f32
      %16 = vector.broadcast %cst_14 : f32 to vector<32x1xf32>
      %17 = arith.maximumf %15, %16 : vector<32x1xf32>
      %18 = tpu.reciprocal %17 : vector<32x1xf32> -> vector<32x1xf32>
      %19 = vector.broadcast %18 : vector<32x1xf32> to vector<32x17xf32>
      %20 = arith.mulf %14, %19 : vector<32x17xf32>
      %c0_15 = arith.constant 0 : index
      %c0_16 = arith.constant 0 : index
      %21 = vector.load %arg6[%c0_15, %c0_16] : memref<17x128xf32, #tpu.memory_space<vmem>>, vector<17x128xf32>
      %cst_17 = arith.constant dense<0.000000e+00> : vector<32x128xf32>
      %22 = tpu.matmul %20, %21, %cst_17 {dimension_numbers = #tpu.dot_dimension_numbers<[1], [0], [0], [1], [0, 0, 1, 1], [], []>} : vector<32x17xf32>, vector<17x128xf32>, vector<32x128xf32> -> vector<32x128xf32>
      %c0_18 = arith.constant 0 : index
      %c0_19 = arith.constant 0 : index
      %c0_20 = arith.constant 0 : index
      %23 = vector.load %arg5[%c0_18, %c0_19, %c0_20] : memref<1x32x17xbf16, #tpu.memory_space<vmem>>, vector<1x32x17xbf16>
      %24 = vector.shape_cast %23 : vector<1x32x17xbf16> to vector<32x17xbf16>
      %25 = arith.extf %24 : vector<32x17xbf16> to vector<32x17xf32>
      %c0_21 = arith.constant 0 : index
      %c0_22 = arith.constant 0 : index
      %26 = vector.load %arg7[%c0_21, %c0_22] : memref<17x128xf32, #tpu.memory_space<vmem>>, vector<17x128xf32>
      %cst_23 = arith.constant dense<0.000000e+00> : vector<32x128xf32>
      %27 = tpu.matmul %25, %26, %cst_23 {dimension_numbers = #tpu.dot_dimension_numbers<[1], [0], [0], [1], [0, 0, 1, 1], [], []>} : vector<32x17xf32>, vector<17x128xf32>, vector<32x128xf32> -> vector<32x128xf32>
      %28 = arith.addf %22, %27 : vector<32x128xf32>
      %c0_24 = arith.constant 0 : index
      %c0_25 = arith.constant 0 : index
      %29 = vector.load %arg8[%c0_24, %c0_25] : memref<1x128xf32, #tpu.memory_space<vmem>>, vector<1x128xf32>
      %30 = vector.broadcast %29 : vector<1x128xf32> to vector<32x128xf32>
      %31 = arith.addf %28, %30 : vector<32x128xf32>
      %c0_26 = arith.constant 0 : index
      %c0_27 = arith.constant 0 : index
      %c0_28 = arith.constant 0 : index
      %32 = vector.load %arg9[%c0_26, %c0_27, %c0_28] : memref<1x32x128xf32, #tpu.memory_space<vmem>>, vector<1x32x128xf32>
      %33 = vector.shape_cast %32 : vector<1x32x128xf32> to vector<32x128xf32>
      %34 = vector.shape_cast %31 : vector<32x128xf32> to vector<1x32x128xf32>
      tpu.vector_store %arg9[%c0_26, %c0_27, %c0_28], %34 {strides = array<i32>} : memref<1x32x128xf32, #tpu.memory_space<vmem>>, vector<1x32x128xf32>,
    } else {
    }
    return
  }
  func.func @transform_0(%arg0: i32, %arg1: i32, %arg2: i32) -> (i32, i32, i32) {
    %c0_i32 = arith.constant 0 : i32
    return %arg0, %arg1, %arg2 : i32, i32, i32
  }
  func.func @transform_1(%arg0: i32, %arg1: i32, %arg2: i32) -> (i32, i32, i32) {
    %c0_i32 = arith.constant 0 : i32
    %c0_i32_0 = arith.constant 0 : i32
    return %arg0, %arg2, %c0_i32 : i32, i32, i32
  }
  func.func @transform_2(%arg0: i32, %arg1: i32, %arg2: i32) -> (i32, i32, i32) {
    %c0_i32 = arith.constant 0 : i32
    %c0_i32_0 = arith.constant 0 : i32
    return %arg0, %arg1, %c0_i32 : i32, i32, i32
  }
  func.func @transform_3(%arg0: i32, %arg1: i32, %arg2: i32) -> (i32, i32) {
    %c0_i32 = arith.constant 0 : i32
    %c0_i32_0 = arith.constant 0 : i32
    %c0_i32_1 = arith.constant 0 : i32
    return %c0_i32, %c0_i32_0 : i32, i32
  }
  func.func @transform_4(%arg0: i32, %arg1: i32, %arg2: i32) -> (i32, i32) {
    %c0_i32 = arith.constant 0 : i32
    %c0_i32_0 = arith.constant 0 : i32
    %c0_i32_1 = arith.constant 0 : i32
    return %c0_i32, %c0_i32_0 : i32, i32
  }
  func.func @transform_5(%arg0: i32, %arg1: i32, %arg2: i32) -> (i32, i32) {
    %c0_i32 = arith.constant 0 : i32
    %c0_i32_0 = arith.constant 0 : i32
    %c0_i32_1 = arith.constant 0 : i32
    return %c0_i32, %c0_i32_0 : i32, i32
  }
  func.func @transform_6(%arg0: i32, %arg1: i32, %arg2: i32) -> (i32, i32, i32) {
    %c0_i32 = arith.constant 0 : i32
    %c0_i32_0 = arith.constant 0 : i32
    return %arg0, %arg1, %c0_i32 : i32, i32, i32
  }
}

</mosaic_0001>

<llo_original>
// kernel: tpu_custom_call.1
$region0: #{tpu_custom_call.1}
  #allocation0 [shape = 'u32[]', space=smem, size = 0x4, offset = 0x4, fixed_abs, tag = 'smem constant byte address 0x4 - core index']
  #allocation1 [shape = 'u32[144,128]{1,0:T(1,128)}', space=vmem, size = 0x12000, scoped, tag = 'internal scratch']
  #allocation2 [shape = 'f32[32,17]{1,0:T(8,128)}', space=vmem, size = 0x4000, scoped, tag = 'scratch operand']
  %s0 = inlined_call_operand.vmem [shape: bf16[2,32,128], index: 0, kind: input, shape index: {}]
  %s1 = inlined_call_operand.vmem [shape: bf16[2,128,17], index: 1, kind: input, shape index: {}]
  %s2 = inlined_call_operand.vmem [shape: bf16[2,128,17], index: 2, kind: input, shape index: {}]
  %s3 = inlined_call_operand.vmem [shape: f32[17,128], index: 3, kind: input, shape index: {}]
  %s4 = inlined_call_operand.vmem [shape: f32[17,128], index: 4, kind: input, shape index: {}]
  %s5 = inlined_call_operand.vmem [shape: f32[1,128], index: 5, kind: input, shape index: {}]
  %s6 = inlined_call_operand.hbm [shape: f32[2,32,128], index: 6, kind: output, shape index: {}]
  %s7 = sld [smem:[#allocation0]]
  $region65: #{tpu_custom_call.1} parent=0
    _
  %s9 = ssub.s32 1, %s7
  %s10 = scalar_select 0, %s9, %s7
  $region1: #{tpu_custom_call.1} parent=0
    #allocation3 [shape = 'u8[32768]{0}', space=vmem, size = 0x8000, scoped, tag = 'output window, operand 0']
    #allocation4 [shape = 's32[2]{0}', space=sflag, size = 0x8, scoped, tag = 'scoped memory for tpu_custom_call.1']
    %11 = vsyncpa [#allocation4], 0
    %s12 = scalar_lea.sflag [#allocation4], 1
    %13 = vsyncpa %s12, 0
    loop: start=0, step=1, limit=4
    $region2: #{tpu_custom_call.1} parent=1 // loop_pre_header
      _
    $region3: #{tpu_custom_call.1} parent=1 // loop_header
      %s15 = sphi 0, %s19
      %p16 = scmp.ge.s32.totalorder %s15, 4
      %s22 = sphi 0, %s41
      %s23 = sphi 0, %s37
      %s24 = sphi 0, %s33
      %s25 = sphi 0, %s22
      %s26 = sphi 0, %s23
      %s27 = sphi 0, %s24
      %s28 = sphi 0, %s25
      %s29 = sphi 0, %s26
      %s30 = sphi 0, %s27
      %s48 = sphi 0, %s50
      %s51 = sphi 0, %s48
      %s52 = sphi 0, %s51
      %s68 = sphi 0, %s52
      %s76 = sphi 0, %s78
      %s79 = sphi 0, %s76
      %s80 = sphi 0, %s79
      %s96 = sphi 0, %s80
      %s104 = sphi 0, %s106
      %s107 = sphi 0, %s104
      %s108 = sphi 0, %s107
      %s124 = sphi 0, %s108
      %s128 = sphi 0, %s128
      %s130 = sphi 0, %s128
      %s131 = sphi 0, %s130
      %s145 = sphi 0, %s131
      %s149 = sphi 0, %s149
      %s151 = sphi 0, %s149
      %s152 = sphi 0, %s151
      %s166 = sphi 0, %s152
      %s170 = sphi 0, %s170
      %s172 = sphi 0, %s170
      %s173 = sphi 0, %s172
      %s187 = sphi 0, %s173
      %s195 = sphi 0, %s197
      %s198 = sphi 0, %s195
      %s199 = sphi 0, %s198
      %s215 = sphi 0, %s199
    $region4: #{tpu_custom_call.1} parent=1 // loop_header_branch
      %18 = sbr.rel (%p16) target = $region8
    $region5: #{tpu_custom_call.1} parent=1 // loop_body
      %s20 = ssub.s32 %s15, 1
      %s21 = ssub.s32 %s15, 2
      %s31 = sadd.s32 1, %s24
      %p32 = scmp.ge.s32.totalorder %s31, 1
      %s33 = scalar_select %p32, 0, %s31
      %s34 = sadd.s32 1, %s23
      %s35 = scalar_select %p32, %s34, %s23
      %p36 = scmp.ge.s32.totalorder %s35, 1
      %s37 = scalar_select %p36, 0, %s35
      %s38 = sadd.s32 1, %s22
      %s39 = scalar_select %p36, %s38, %s22
      %p40 = scmp.ge.s32.totalorder %s39, 2
      %s41 = scalar_select %p40, 0, %s39
      %s42 = ssub.s32 %s22, %s41
      %s43 = ssub.s32 %s23, %s37
      %s44 = sor.u32 %s42, %s43
      %s45 = ssub.s32 %s24, %s33
      %s46 = sor.u32 %s44, %s45
      %p47 = scmp.eq.s32.totalorder %s46, 0
      %s49 = sadd.s32 %s48, 1
      %s50 = scalar_select %p47, %s48, %s49
      %p53 = pneg %p47
      %p54 = scmp.eq.s32.totalorder %s15, 1
      %p55 = por %p53, %p54
      %p56 = scmp.ne.s32.totalorder %s48, %s51
      %p57 = scmp.eq.s32.totalorder %s15, 0
      %p58 = por %p56, %p57
      %p59 = scmp.ne.s32.totalorder %s48, %s51
      %p60 = scmp.eq.s32.totalorder %s20, 1
      %p61 = por %p59, %p60
      %p62 = scmp.ne.s32.totalorder %s51, %s52
      %p63 = scmp.eq.s32.totalorder %s20, 0
      %p64 = por %p62, %p63
      %p65 = scmp.ne.s32.totalorder %s51, %s52
      %p66 = scmp.eq.s32.totalorder %s21, 1
      %p67 = por %p65, %p66
      %p69 = scmp.ne.s32.totalorder %s52, %s68
      %p70 = scmp.eq.s32.totalorder %s21, 0
      %p71 = por %p69, %p70
      %s72 = ssub.s32 %s22, %s41
      %s73 = ssub.s32 %s24, %s33
      %s74 = sor.u32 %s72, %s73
      %p75 = scmp.eq.s32.totalorder %s74, 0
      %s77 = sadd.s32 %s76, 1
      %s78 = scalar_select %p75, %s76, %s77
      %p81 = pneg %p75
      %p82 = scmp.eq.s32.totalorder %s15, 1
      %p83 = por %p81, %p82
      %p84 = scmp.ne.s32.totalorder %s76, %s79
      %p85 = scmp.eq.s32.totalorder %s15, 0
      %p86 = por %p84, %p85
      %p87 = scmp.ne.s32.totalorder %s76, %s79
      %p88 = scmp.eq.s32.totalorder %s20, 1
      %p89 = por %p87, %p88
      %p90 = scmp.ne.s32.totalorder %s79, %s80
      %p91 = scmp.eq.s32.totalorder %s20, 0
      %p92 = por %p90, %p91
      %p93 = scmp.ne.s32.totalorder %s79, %s80
      %p94 = scmp.eq.s32.totalorder %s21, 1
      %p95 = por %p93, %p94
      %p97 = scmp.ne.s32.totalorder %s80, %s96
      %p98 = scmp.eq.s32.totalorder %s21, 0
      %p99 = por %p97, %p98
      %s100 = ssub.s32 %s22, %s41
      %s101 = ssub.s32 %s23, %s37
      %s102 = sor.u32 %s100, %s101
      %p103 = scmp.eq.s32.totalorder %s102, 0
      %s105 = sadd.s32 %s104, 1
      %s106 = scalar_select %p103, %s104, %s105
      %p109 = pneg %p103
      %p110 = scmp.eq.s32.totalorder %s15, 1
      %p111 = por %p109, %p110
      %p112 = scmp.ne.s32.totalorder %s104, %s107
      %p113 = scmp.eq.s32.totalorder %s15, 0
      %p114 = por %p112, %p113
      %p115 = scmp.ne.s32.totalorder %s104, %s107
      %p116 = scmp.eq.s32.totalorder %s20, 1
      %p117 = por %p115, %p116
      %p118 = scmp.ne.s32.totalorder %s107, %s108
      %p119 = scmp.eq.s32.totalorder %s20, 0
      %p120 = por %p118, %p119
      %p121 = scmp.ne.s32.totalorder %s107, %s108
      %p122 = scmp.eq.s32.totalorder %s21, 1
      %p123 = por %p121, %p122
      %p125 = scmp.ne.s32.totalorder %s108, %s124
      %p126 = scmp.eq.s32.totalorder %s21, 0
      %p127 = por %p125, %p126
      %s129 = sadd.s32 %s128, 1
      %p132 = scmp.eq.s32.totalorder %s15, 1
      %p133 = scmp.ne.s32.totalorder %s128, %s130
      %p134 = scmp.eq.s32.totalorder %s15, 0
      %p135 = por %p133, %p134
      %p136 = scmp.ne.s32.totalorder %s128, %s130
      %p137 = scmp.eq.s32.totalorder %s20, 1
      %p138 = por %p136, %p137
      %p139 = scmp.ne.s32.totalorder %s130, %s131
      %p140 = scmp.eq.s32.totalorder %s20, 0
      %p141 = por %p139, %p140
      %p142 = scmp.ne.s32.totalorder %s130, %s131
      %p143 = scmp.eq.s32.totalorder %s21, 1
      %p144 = por %p142, %p143
      %p146 = scmp.ne.s32.totalorder %s131, %s145
      %p147 = scmp.eq.s32.totalorder %s21, 0
      %p148 = por %p146, %p147
      %s150 = sadd.s32 %s149, 1
      %p153 = scmp.eq.s32.totalorder %s15, 1
      %p154 = scmp.ne.s32.totalorder %s149, %s151
      %p155 = scmp.eq.s32.totalorder %s15, 0
      %p156 = por %p154, %p155
      %p157 = scmp.ne.s32.totalorder %s149, %s151
      %p158 = scmp.eq.s32.totalorder %s20, 1
      %p159 = por %p157, %p158
      %p160 = scmp.ne.s32.totalorder %s151, %s152
      %p161 = scmp.eq.s32.totalorder %s20, 0
      %p162 = por %p160, %p161
      %p163 = scmp.ne.s32.totalorder %s151, %s152
      %p164 = scmp.eq.s32.totalorder %s21, 1
      %p165 = por %p163, %p164
      %p167 = scmp.ne.s32.totalorder %s152, %s166
      %p168 = scmp.eq.s32.totalorder %s21, 0
      %p169 = por %p167, %p168
      %s171 = sadd.s32 %s170, 1
      %p174 = scmp.eq.s32.totalorder %s15, 1
      %p175 = scmp.ne.s32.totalorder %s170, %s172
      %p176 = scmp.eq.s32.totalorder %s15, 0
      %p177 = por %p175, %p176
      %p178 = scmp.ne.s32.totalorder %s170, %s172
      %p179 = scmp.eq.s32.totalorder %s20, 1
      %p180 = por %p178, %p179
      %p181 = scmp.ne.s32.totalorder %s172, %s173
      %p182 = scmp.eq.s32.totalorder %s20, 0
      %p183 = por %p181, %p182
      %p184 = scmp.ne.s32.totalorder %s172, %s173
      %p185 = scmp.eq.s32.totalorder %s21, 1
      %p186 = por %p184, %p185
      %p188 = scmp.ne.s32.totalorder %s173, %s187
      %p189 = scmp.eq.s32.totalorder %s21, 0
      %p190 = por %p188, %p189
      %s191 = ssub.s32 %s22, %s41
      %s192 = ssub.s32 %s23, %s37
      %s193 = sor.u32 %s191, %s192
      %p194 = scmp.eq.s32.totalorder %s193, 0
      %s196 = sadd.s32 %s195, 1
      %s197 = scalar_select %p194, %s195, %s196
      %p200 = pneg %p194
      %p201 = scmp.eq.s32.totalorder %s15, 1
      %p202 = por %p200, %p201
      %p203 = scmp.ne.s32.totalorder %s195, %s198
      %p204 = scmp.eq.s32.totalorder %s15, 0
      %p205 = por %p203, %p204
      %p206 = scmp.ne.s32.totalorder %s195, %s198
      %p207 = scmp.eq.s32.totalorder %s20, 1
      %p208 = por %p206, %p207
      %p209 = scmp.ne.s32.totalorder %s198, %s199
      %p210 = scmp.eq.s32.totalorder %s20, 0
      %p211 = por %p209, %p210
      %p212 = scmp.ne.s32.totalorder %s198, %s199
      %p213 = scmp.eq.s32.totalorder %s21, 1
      %p214 = por %p212, %p213
      %p216 = scmp.ne.s32.totalorder %s199, %s215
      %p217 = scmp.eq.s32.totalorder %s21, 0
      %p218 = por %p216, %p217
      %p219 = scmp.le.s32.totalorder 1, %s15
      %p220 = scmp.lt.s32.totalorder %s15, 3
      %p221 = pnand %p219, %p220
      %p222 = pneg %p221
      // Predicated region
      $region9: #{tpu_custom_call.1} parent=5 // pred_check
        _
      $region10: #{tpu_custom_call.1} parent=5 // pred_check_branch
        %224 = sbr.rel (%p221) target = $region12
      $region11: #{tpu_custom_call.1} parent=5 // pred_region
        %s225 = ssub.s32 %s15, 1
        // Predicated region
        $region13: #{tpu_custom_call.1} parent=11 // pred_check
          %p226 = pneg %p141
        $region14: #{tpu_custom_call.1} parent=11 // pred_check_branch
          %228 = sbr.rel (%p226) target = $region16
        $region15: #{tpu_custom_call.1} parent=11 // pred_region
          _
        $region16: #{tpu_custom_call.1} parent=11 // pred_fallthru
          _
        // Predicated region
        $region17: #{tpu_custom_call.1} parent=11 // pred_check
          %p229 = pneg %p162
        $region18: #{tpu_custom_call.1} parent=11 // pred_check_branch
          %231 = sbr.rel (%p229) target = $region20
        $region19: #{tpu_custom_call.1} parent=11 // pred_region
          _
        $region20: #{tpu_custom_call.1} parent=11 // pred_fallthru
          _
        // Predicated region
        $region21: #{tpu_custom_call.1} parent=11 // pred_check
          %p232 = pneg %p183
        $region22: #{tpu_custom_call.1} parent=11 // pred_check_branch
          %234 = sbr.rel (%p232) target = $region24
        $region23: #{tpu_custom_call.1} parent=11 // pred_region
          _
        $region24: #{tpu_custom_call.1} parent=11 // pred_fallthru
          _
      $region12: #{tpu_custom_call.1} parent=5 // pred_fallthru
        _
      %p235 = scmp.lt.s32.totalorder %s15, 2
      // Predicated region
      $region25: #{tpu_custom_call.1} parent=5 // pred_check
        %p236 = pneg %p235
      $region26: #{tpu_custom_call.1} parent=5 // pred_check_branch
        %238 = sbr.rel (%p236) target = $region28
      $region27: #{tpu_custom_call.1} parent=5 // pred_region
        // Predicated region
        $region29: #{tpu_custom_call.1} parent=27 // pred_check
          %p239 = pneg %p58
        $region30: #{tpu_custom_call.1} parent=27 // pred_check_branch
          %241 = sbr.rel (%p239) target = $region32
        $region31: #{tpu_custom_call.1} parent=27 // pred_region
          %s242 = smul.u32 4, %s23
          %p243 = scmp.lt.s32.totalorder %s22, 1
          %s244 = scalar_select %p243, %s22, 1
          %p245 = scmp.lt.s32.totalorder %s242, 3
          %s246 = scalar_select %p245, %s242, 3
          %p247 = scmp.lt.s32.totalorder %s24, 0
          %s248 = scalar_select %p247, %s24, 0
          %s249 = sadd.s32 %s248, %s246
          %s250 = smul.addr %s244, 4
          %s251 = sadd.s32 %s249, %s250
          %s252 = smul.addr %s251, 4
          %s253 = scalar_lea.vmem %s0, %s252
          %s254 = smul.u32 4, %s23
        $region32: #{tpu_custom_call.1} parent=27 // pred_fallthru
          _
        // Predicated region
        $region33: #{tpu_custom_call.1} parent=27 // pred_check
          %p255 = pneg %p86
        $region34: #{tpu_custom_call.1} parent=27 // pred_check_branch
          %257 = sbr.rel (%p255) target = $region36
        $region35: #{tpu_custom_call.1} parent=27 // pred_region
          %s258 = smul.u32 16, %s24
          %p259 = scmp.lt.s32.totalorder %s22, 1
          %s260 = scalar_select %p259, %s22, 1
          %p261 = scmp.lt.s32.totalorder %s258, 15
          %s262 = scalar_select %p261, %s258, 15
          %s263 = smul.addr %s260, 16
          %s264 = sadd.s32 %s262, %s263
          %s265 = smul.addr %s264, 4
          %s266 = scalar_lea.vmem %s1, %s265
          %s267 = smul.u32 16, %s24
        $region36: #{tpu_custom_call.1} parent=27 // pred_fallthru
          _
        // Predicated region
        $region37: #{tpu_custom_call.1} parent=27 // pred_check
          %p268 = pneg %p114
        $region38: #{tpu_custom_call.1} parent=27 // pred_check_branch
          %270 = sbr.rel (%p268) target = $region40
        $region39: #{tpu_custom_call.1} parent=27 // pred_region
          %s271 = smul.u32 4, %s23
          %p272 = scmp.lt.s32.totalorder %s22, 1
          %s273 = scalar_select %p272, %s22, 1
          %p274 = scmp.lt.s32.totalorder %s271, 15
          %s275 = scalar_select %p274, %s271, 15
          %s276 = smul.addr %s273, 16
          %s277 = sadd.s32 %s275, %s276
          %s278 = smul.addr %s277, 4
          %s279 = scalar_lea.vmem %s2, %s278
          %s280 = smul.u32 4, %s23
        $region40: #{tpu_custom_call.1} parent=27 // pred_fallthru
          _
      $region28: #{tpu_custom_call.1} parent=5 // pred_fallthru
        _
      %p281 = scmp.le.s32.totalorder 1, %s15
      %p282 = scmp.lt.s32.totalorder %s15, 3
      %p283 = pnand %p281, %p282
      %p284 = pneg %p283
      // Predicated region
      $region41: #{tpu_custom_call.1} parent=5 // pred_check
        _
      $region42: #{tpu_custom_call.1} parent=5 // pred_check_branch
        %286 = sbr.rel (%p283) target = $region44
      $region43: #{tpu_custom_call.1} parent=5 // pred_region
        %s287 = ssub.s32 %s15, 1
        %s288 = smul.u32 4, %s26
        %p289 = scmp.lt.s32.totalorder %s25, 1
        %s290 = scalar_select %p289, %s25, 1
        %p291 = scmp.lt.s32.totalorder %s288, 3
        %s292 = scalar_select %p291, %s288, 3
        %p293 = scmp.lt.s32.totalorder %s27, 0
        %s294 = scalar_select %p293, %s27, 0
        %s295 = sadd.s32 %s294, %s292
        %s296 = smul.addr %s290, 4
        %s297 = sadd.s32 %s295, %s296
        %s298 = smul.addr %s297, 4
        %s299 = scalar_lea.vmem %s0, %s298
        %p300 = pneg %p64
        %p301 = pneg %p61
        %s302 = smul.u32 16, %s27
        %p303 = scmp.lt.s32.totalorder %s25, 1
        %s304 = scalar_select %p303, %s25, 1
        %p305 = scmp.lt.s32.totalorder %s302, 15
        %s306 = scalar_select %p305, %s302, 15
        %s307 = smul.addr %s304, 16
        %s308 = sadd.s32 %s306, %s307
        %s309 = smul.addr %s308, 4
        %s310 = scalar_lea.vmem %s1, %s309
        %p311 = pneg %p92
        %p312 = pneg %p89
        %s313 = smul.u32 4, %s26
        %p314 = scmp.lt.s32.totalorder %s25, 1
        %s315 = scalar_select %p314, %s25, 1
        %p316 = scmp.lt.s32.totalorder %s313, 15
        %s317 = scalar_select %p316, %s313, 15
        %s318 = smul.addr %s315, 16
        %s319 = sadd.s32 %s317, %s318
        %s320 = smul.addr %s319, 4
        %s321 = scalar_lea.vmem %s2, %s320
        %p322 = pneg %p120
        %p323 = pneg %p117
        %p324 = pneg %p141
        %p325 = pneg %p138
        %p326 = pneg %p162
        %p327 = pneg %p159
        %p328 = pneg %p183
        %p329 = pneg %p180
        %p330 = pneg %p211
        %p331 = pneg %p208
        %s332 = sand.u32 %s198, 1
        %s333 = scalar_lea.sflag [#allocation4], %s332
        %s334 = sand.u32 %s198, 1
        %s335 = smul.addr %s334, 32
        %s336 = scalar_lea.vmem [#allocation3], %s335
        %s337 = smul.u32 4, %s26
        %p338 = scmp.lt.s32.totalorder %s25, 1
        %s339 = scalar_select %p338, %s25, 1
        %p340 = scmp.lt.s32.totalorder %s337, 3
        %s341 = scalar_select %p340, %s337, 3
        %p342 = scmp.lt.s32.totalorder %s27, 0
        %s343 = scalar_select %p342, %s27, 0
        %s344 = sadd.s32 %s343, %s341
        %s345 = smul.addr %s339, 4
        %s346 = sadd.s32 %s344, %s345
        %s347 = smul.addr %s346, 4
        %s348 = scalar_lea.vmem %s0, %s347
        %s349 = smul.u32 4, %s26
        %s350 = smul.u32 16, %s27
        %p351 = scmp.lt.s32.totalorder %s25, 1
        %s352 = scalar_select %p351, %s25, 1
        %p353 = scmp.lt.s32.totalorder %s350, 15
        %s354 = scalar_select %p353, %s350, 15
        %s355 = smul.addr %s352, 16
        %s356 = sadd.s32 %s354, %s355
        %s357 = smul.addr %s356, 4
        %s358 = scalar_lea.vmem %s1, %s357
        %s359 = smul.u32 16, %s27
        %s360 = smul.u32 4, %s26
        %p361 = scmp.lt.s32.totalorder %s25, 1
        %s362 = scalar_select %p361, %s25, 1
        %p363 = scmp.lt.s32.totalorder %s360, 15
        %s364 = scalar_select %p363, %s360, 15
        %s365 = smul.addr %s362, 16
        %s366 = sadd.s32 %s364, %s365
        %s367 = smul.addr %s366, 4
        %s368 = scalar_lea.vmem %s2, %s367
        %s369 = smul.u32 4, %s26
        %s370 = smul.u32 4, %s26
        %p372 = scmp.eq.s32.totalorder %s27, 0
        // Predicated region
        $region45: #{tpu_custom_call.1} parent=43 // pred_check
          %p373 = pneg %p372
        $region46: #{tpu_custom_call.1} parent=43 // pred_check_branch
          %375 = sbr.rel (%p373) target = $region48
        $region47: #{tpu_custom_call.1} parent=43 // pred_region
          %vm376 = vcmask 138240
          %377 = vst.msk [vmem:[#allocation2] sm:$0xff] %vm376, 0.0
          %378 = vst.msk [vmem:[#allocation2 + $0x8] sm:$0xff] %vm376, 0.0
          %379 = vst.msk [vmem:[#allocation2 + $0x10] sm:$0xff] %vm376, 0.0
          %380 = vst.msk [vmem:[#allocation2 + $0x18] sm:$0xff] %vm376, 0.0
        $region48: #{tpu_custom_call.1} parent=43 // pred_fallthru
          _
        %v381 = vld [vmem:[#allocation2] sm:$0xff]
        %v382 = vld [vmem:[#allocation2 + $0x8] sm:$0xff]
        %v383 = vld [vmem:[#allocation2 + $0x10] sm:$0xff]
        %v384 = vld [vmem:[#allocation2 + $0x18] sm:$0xff]
        %v385 = vld [vmem:[%s348] sm:$0xf]
        %v386 = vld [vmem:[%s348 + $0x4] sm:$0xf]
        %v387 = vld [vmem:[%s348 + $0x8] sm:$0xf]
        %v388 = vld [vmem:[%s348 + $0xc] sm:$0xf]
        %v389 = vld [vmem:[%s358] sm:$0xf]
        %v390 = vld [vmem:[%s358 + $0x4] sm:$0xf]
        %v391 = vld [vmem:[%s358 + $0x8] sm:$0xf]
        %v392 = vld [vmem:[%s358 + $0xc] sm:$0xf]
        %v393 = vld [vmem:[%s358 + $0x10] sm:$0xf]
        %v394 = vld [vmem:[%s358 + $0x14] sm:$0xf]
        %v395 = vld [vmem:[%s358 + $0x18] sm:$0xf]
        %v396 = vld [vmem:[%s358 + $0x1c] sm:$0xf]
        %v397 = vld [vmem:[%s358 + $0x20] sm:$0xf]
        %v398 = vld [vmem:[%s358 + $0x24] sm:$0xf]
        %v399 = vld [vmem:[%s358 + $0x28] sm:$0xf]
        %v400 = vld [vmem:[%s358 + $0x2c] sm:$0xf]
        %v401 = vld [vmem:[%s358 + $0x30] sm:$0xf]
        %v402 = vld [vmem:[%s358 + $0x34] sm:$0xf]
        %v403 = vld [vmem:[%s358 + $0x38] sm:$0xf]
        %v404 = vld [vmem:[%s358 + $0x3c] sm:$0xf]
        %v409 = vunpack.c.l.b16 %v385
        %v410 = vunpack.c.l.b16 %v386
        %v411 = vunpack.c.l.b16 %v387
        %v412 = vunpack.c.l.b16 %v388
        %v413 = vpack.c.b16 %v410, %v409
        %v414 = vpack.c.b16 %v412, %v411
        %v433 = vunpack.c.l.b16 %v389
        %v434 = vunpack.c.l.b16 %v390
        %v435 = vunpack.c.l.b16 %v391
        %v436 = vunpack.c.l.b16 %v392
        %v437 = vunpack.c.l.b16 %v393
        %v438 = vunpack.c.l.b16 %v394
        %v439 = vunpack.c.l.b16 %v395
        %v440 = vunpack.c.l.b16 %v396
        %v441 = vunpack.c.l.b16 %v397
        %v442 = vunpack.c.l.b16 %v398
        %v443 = vunpack.c.l.b16 %v399
        %v444 = vunpack.c.l.b16 %v400
        %v445 = vunpack.c.l.b16 %v401
        %v446 = vunpack.c.l.b16 %v402
        %v447 = vunpack.c.l.b16 %v403
        %v448 = vunpack.c.l.b16 %v404
        %v449 = vpack.c.b16 %v434, %v433
        %v450 = vpack.c.b16 %v436, %v435
        %v451 = vpack.c.b16 %v438, %v437
        %v452 = vpack.c.b16 %v440, %v439
        %v453 = vpack.c.b16 %v442, %v441
        %v454 = vpack.c.b16 %v444, %v443
        %v455 = vpack.c.b16 %v446, %v445
        %v456 = vpack.c.b16 %v448, %v447
        %465 = vmatprep.subr.bf16.mxu0 0
        %466 = vmatpush1.bf16.msra.mxu0 %v456
        %467 = vmatprep.subr.bf16.mxu0 0
        %468 = vmatpush1.bf16.msra.mxu0 %v455
        %469 = vmatprep.subr.bf16.mxu0 0
        %470 = vmatpush1.bf16.msra.mxu0 %v454
        %471 = vmatprep.subr.bf16.mxu0 0
        %472 = vmatpush1.bf16.msra.mxu0 %v453
        %473 = vmatprep.subr.bf16.mxu0 0
        %474 = vmatpush1.bf16.msra.mxu0 %v452
        %475 = vmatprep.subr.bf16.mxu0 0
        %476 = vmatpush1.bf16.msra.mxu0 %v451
        %477 = vmatprep.subr.bf16.mxu0 0
        %478 = vmatpush1.bf16.msra.mxu0 %v450
        %479 = vmatprep.subr.bf16.mxu0 0
        %480 = vmatpush1.bf16.msra.mxu0 %v449
        %481 = vmatprep.subr.bf16.mxu0 0
        %482 = vmatpush2.bf16.msra.mxu0 0
        %483 = vmatprep.subr.bf16.mxu0 0
        %484 = vmatpush2.bf16.msra.mxu0 0
        %485 = vmatprep.subr.bf16.mxu0 0
        %486 = vmatpush2.bf16.msra.mxu0 0
        %487 = vmatprep.subr.bf16.mxu0 0
        %488 = vmatpush2.bf16.msra.mxu0 0
        %489 = vmatprep.subr.bf16.mxu0 0
        %490 = vmatpush2.bf16.msra.mxu0 0
        %491 = vmatprep.subr.bf16.mxu0 0
        %492 = vmatpush2.bf16.msra.mxu0 0
        %493 = vmatprep.subr.bf16.mxu0 0
        %494 = vmatpush2.bf16.msra.mxu0 0
        %495 = vmatprep.subr.bf16.mxu0 0
        %496 = vmatpush2.bf16.msra.mxu0 0
        %497 = vmatprep.mubr.bf16.mxu0 0
        %498 = vmatmul.mubr.bf16.gmra.mxu0 %v413
        %v499 = vpop.f32.mrf.mxu0
        %v500 = vadd.f32 0.0, %v499
        %v501 = vpop.f32.mrf.mxu0
        %v502 = vpop.f32.mrf.mxu0
        %v503 = vadd.f32 0.0, %v502
        %v504 = vpop.f32.mrf.mxu0
        %505 = vmatprep.mubr.bf16.mxu0 0
        %506 = vmatmul.mubr.bf16.gmra.mxu0 %v414
        %v507 = vpop.f32.mrf.mxu0
        %v508 = vadd.f32 0.0, %v507
        %v509 = vpop.f32.mrf.mxu0
        %v510 = vpop.f32.mrf.mxu0
        %v511 = vadd.f32 0.0, %v510
        %v512 = vpop.f32.mrf.mxu0
        %513 = vdwg.mxu0
        %v514 = vadd.f32 %v381, %v500
        %v515 = vadd.f32 %v382, %v503
        %v516 = vadd.f32 %v383, %v508
        %v517 = vadd.f32 %v384, %v511
        %vm518 = vcmask 138240
        %519 = vst.msk [vmem:[#allocation2] sm:$0xff] %vm518, %v514
        %520 = vst.msk [vmem:[#allocation2 + $0x8] sm:$0xff] %vm518, %v515
        %521 = vst.msk [vmem:[#allocation2 + $0x10] sm:$0xff] %vm518, %v516
        %522 = vst.msk [vmem:[#allocation2 + $0x18] sm:$0xff] %vm518, %v517
        // Predicated region
        $region49: #{tpu_custom_call.1} parent=43 // pred_check
          %p523 = pneg %p372
        $region50: #{tpu_custom_call.1} parent=43 // pred_check_branch
          %525 = sbr.rel (%p523) target = $region52
        $region51: #{tpu_custom_call.1} parent=43 // pred_region
          %v526 = vld [vmem:[#allocation2] sm:$0xff]
          %v527 = vld [vmem:[#allocation2 + $0x8] sm:$0xff]
          %v528 = vld [vmem:[#allocation2 + $0x10] sm:$0xff]
          %v529 = vld [vmem:[#allocation2 + $0x18] sm:$0xff]
          %v530 = vmax.f32 %v526, 1.0
          %v531 = vmax.f32 %v527, 1.0
          %v532 = vmax.f32 %v528, 1.0
          %v533 = vmax.f32 %v529, 1.0
          %v534 = vrcp.pop %v530
          %v535 = vrcp.pop %v531
          %v536 = vrcp.pop %v532
          %v537 = vrcp.pop %v533
          %539 = vset.pattern.permute.xlu0 16
          %540 = vperm.xlu0 %539, %v534
          %v541 = vpop.permute.xlu0 %540
          %544 = vset.pattern.permute.xlu0 16
          %545 = vperm.xlu0 %544, %v535
          %v546 = vpop.permute.xlu0 %545
          %549 = vset.pattern.permute.xlu0 16
          %550 = vperm.xlu0 %549, %v536
          %v551 = vpop.permute.xlu0 %550
          %554 = vset.pattern.permute.xlu0 16
          %555 = vperm.xlu0 %554, %v537
          %v556 = vpop.permute.xlu0 %555
          %v558 = vmul.f32 %v526, %v541
          %v559 = vmul.f32 %v527, %v546
          %v560 = vmul.f32 %v528, %v551
          %v561 = vmul.f32 %v529, %v556
          %v562 = vld [vmem:[%s3] sm:$0xff]
          %v563 = vld [vmem:[%s3 + $0x8] sm:$0xff]
          %v564 = vld [vmem:[%s3 + $0x10] sm:$0x1]
          %v565 = vld [vmem:[%s368] sm:$0xf]
          %v566 = vld [vmem:[%s368 + $0x4] sm:$0xf]
          %v567 = vld [vmem:[%s368 + $0x8] sm:$0xf]
          %v568 = vld [vmem:[%s368 + $0xc] sm:$0xf]
          %v569 = vunpack.c.l.bf16 %v565
          %v570 = vunpack.c.l.bf16 %v566
          %v571 = vunpack.c.l.bf16 %v567
          %v572 = vunpack.c.l.bf16 %v568
          %v573 = vld [vmem:[%s4] sm:$0xff]
          %v574 = vld [vmem:[%s4 + $0x8] sm:$0xff]
          %v575 = vld [vmem:[%s4 + $0x10] sm:$0x1]
          %v577 = vsel %vm518, %v569, 0
          %v580 = vsel %vm518, %v570, 0
          %v583 = vsel %vm518, %v571, 0
          %v586 = vsel %vm518, %v572, 0
          %vm588 = vcmask 1040384
          %v590 = vsel %vm588, %v575, 0
          %592 = vmatprep.subr.mxu0 0.0
          %593 = vmatpush1.msra.mxu0 0.0
          %594 = vmatprep.subr.mxu0 0.0
          %595 = vmatpush1.msra.mxu0 0.0
          %596 = vmatprep.subr.mxu0 0.0
          %597 = vmatpush1.msra.mxu0 0.0
          %598 = vmatprep.subr.mxu0 0.0
          %599 = vmatpush1.msra.mxu0 0.0
          %600 = vmatprep.subr.mxu0 0.0
          %601 = vmatpush1.msra.mxu0 0.0
          %602 = vmatprep.subr.mxu0 0.0
          %603 = vmatpush1.msra.mxu0 0.0
          %604 = vmatprep.subr.mxu0 0.0
          %605 = vmatpush1.msra.mxu0 0.0
          %606 = vmatprep.subr.mxu0 0.0
          %607 = vmatpush1.msra.mxu0 0.0
          %608 = vmatprep.subr.mxu0 0.0
          %609 = vmatpush1.msra.mxu0 0.0
          %610 = vmatprep.subr.mxu0 0.0
          %611 = vmatpush1.msra.mxu0 0.0
          %612 = vmatprep.subr.mxu0 0.0
          %613 = vmatpush1.msra.mxu0 0.0
          %614 = vmatprep.subr.mxu0 0.0
          %615 = vmatpush1.msra.mxu0 0.0
          %616 = vmatprep.subr.mxu0 0.0
          %617 = vmatpush1.msra.mxu0 0.0
          %618 = vmatprep.subr.mxu0 0.0
          %619 = vmatpush1.msra.mxu0 %v590
          %620 = vmatprep.subr.mxu0 0.0
          %621 = vmatpush1.msra.mxu0 %v574
          %622 = vmatprep.subr.mxu0 0.0
          %623 = vmatpush1.msra.mxu0 %v573
          %624 = vmatprep.subr.mxu0 0.0
          %625 = vmatpush2.msra.mxu0 0.0
          %626 = vmatprep.subr.mxu0 0.0
          %627 = vmatpush2.msra.mxu0 0.0
          %628 = vmatprep.subr.mxu0 0.0
          %629 = vmatpush2.msra.mxu0 0.0
          %630 = vmatprep.subr.mxu0 0.0
          %631 = vmatpush2.msra.mxu0 0.0
          %632 = vmatprep.subr.mxu0 0.0
          %633 = vmatpush2.msra.mxu0 0.0
          %634 = vmatprep.subr.mxu0 0.0
          %635 = vmatpush2.msra.mxu0 0.0
          %636 = vmatprep.subr.mxu0 0.0
          %637 = vmatpush2.msra.mxu0 0.0
          %638 = vmatprep.subr.mxu0 0.0
          %639 = vmatpush2.msra.mxu0 0.0
          %640 = vmatprep.subr.mxu0 0.0
          %641 = vmatpush2.msra.mxu0 0.0
          %642 = vmatprep.subr.mxu0 0.0
          %643 = vmatpush2.msra.mxu0 0.0
          %644 = vmatprep.subr.mxu0 0.0
          %645 = vmatpush2.msra.mxu0 0.0
          %646 = vmatprep.subr.mxu0 0.0
          %647 = vmatpush2.msra.mxu0 0.0
          %648 = vmatprep.subr.mxu0 0.0
          %649 = vmatpush2.msra.mxu0 0.0
          %650 = vmatprep.subr.mxu0 0.0
          %651 = vmatpush2.msra.mxu0 0.0
          %652 = vmatprep.subr.mxu0 0.0
          %653 = vmatpush2.msra.mxu0 0.0
          %654 = vmatprep.subr.mxu0 0.0
          %655 = vmatpush2.msra.mxu0 0.0
          %656 = vmatprep.mubr.f32.mxu0 0.0
          %657 = vmatmul.mubr.f32.gmra.mxu0 %v577
          %v658 = vpop.f32.mrf.mxu0
          %v659 = vadd.f32 0.0, %v658
          %v660 = vpop.f32.mrf.mxu0
          %661 = vmatprep.mubr.f32.mxu0 0.0
          %662 = vmatmul.mubr.f32.gmra.mxu0 %v580
          %v663 = vpop.f32.mrf.mxu0
          %v664 = vadd.f32 0.0, %v663
          %v665 = vpop.f32.mrf.mxu0
          %666 = vmatprep.mubr.f32.mxu0 0.0
          %667 = vmatmul.mubr.f32.gmra.mxu0 %v583
          %v668 = vpop.f32.mrf.mxu0
          %v669 = vadd.f32 0.0, %v668
          %v670 = vpop.f32.mrf.mxu0
          %671 = vmatprep.mubr.f32.mxu0 0.0
          %672 = vmatmul.mubr.f32.gmra.mxu0 %v586
          %v673 = vpop.f32.mrf.mxu0
          %v674 = vadd.f32 0.0, %v673
          %v675 = vpop.f32.mrf.mxu0
          %676 = vdwg.mxu0
          %v678 = vsel %vm518, %v558, 0
          %v681 = vsel %vm518, %v559, 0
          %v684 = vsel %vm518, %v560, 0
          %v687 = vsel %vm518, %v561, 0
          %v690 = vsel %vm588, %v564, 0
          %692 = vmatprep.subr.mxu0 0.0
          %693 = vmatpush1.msra.mxu0 0.0
          %694 = vmatprep.subr.mxu0 0.0
          %695 = vmatpush1.msra.mxu0 0.0
          %696 = vmatprep.subr.mxu0 0.0
          %697 = vmatpush1.msra.mxu0 0.0
          %698 = vmatprep.subr.mxu0 0.0
          %699 = vmatpush1.msra.mxu0 0.0
          %700 = vmatprep.subr.mxu0 0.0
          %701 = vmatpush1.msra.mxu0 0.0
          %702 = vmatprep.subr.mxu0 0.0
          %703 = vmatpush1.msra.mxu0 0.0
          %704 = vmatprep.subr.mxu0 0.0
          %705 = vmatpush1.msra.mxu0 0.0
          %706 = vmatprep.subr.mxu0 0.0
          %707 = vmatpush1.msra.mxu0 0.0
          %708 = vmatprep.subr.mxu0 0.0
          %709 = vmatpush1.msra.mxu0 0.0
          %710 = vmatprep.subr.mxu0 0.0
          %711 = vmatpush1.msra.mxu0 0.0
          %712 = vmatprep.subr.mxu0 0.0
          %713 = vmatpush1.msra.mxu0 0.0
          %714 = vmatprep.subr.mxu0 0.0
          %715 = vmatpush1.msra.mxu0 0.0
          %716 = vmatprep.subr.mxu0 0.0
          %717 = vmatpush1.msra.mxu0 0.0
          %718 = vmatprep.subr.mxu0 0.0
          %719 = vmatpush1.msra.mxu0 %v690
          %720 = vmatprep.subr.mxu0 0.0
          %721 = vmatpush1.msra.mxu0 %v563
          %722 = vmatprep.subr.mxu0 0.0
          %723 = vmatpush1.msra.mxu0 %v562
          %724 = vmatprep.subr.mxu0 0.0
          %725 = vmatpush2.msra.mxu0 0.0
          %726 = vmatprep.subr.mxu0 0.0
          %727 = vmatpush2.msra.mxu0 0.0
          %728 = vmatprep.subr.mxu0 0.0
          %729 = vmatpush2.msra.mxu0 0.0
          %730 = vmatprep.subr.mxu0 0.0
          %731 = vmatpush2.msra.mxu0 0.0
          %732 = vmatprep.subr.mxu0 0.0
          %733 = vmatpush2.msra.mxu0 0.0
          %734 = vmatprep.subr.mxu0 0.0
          %735 = vmatpush2.msra.mxu0 0.0
          %736 = vmatprep.subr.mxu0 0.0
          %737 = vmatpush2.msra.mxu0 0.0
          %738 = vmatprep.subr.mxu0 0.0
          %739 = vmatpush2.msra.mxu0 0.0
          %740 = vmatprep.subr.mxu0 0.0
          %741 = vmatpush2.msra.mxu0 0.0
          %742 = vmatprep.subr.mxu0 0.0
          %743 = vmatpush2.msra.mxu0 0.0
          %744 = vmatprep.subr.mxu0 0.0
          %745 = vmatpush2.msra.mxu0 0.0
          %746 = vmatprep.subr.mxu0 0.0
          %747 = vmatpush2.msra.mxu0 0.0
          %748 = vmatprep.subr.mxu0 0.0
          %749 = vmatpush2.msra.mxu0 0.0
          %750 = vmatprep.subr.mxu0 0.0
          %751 = vmatpush2.msra.mxu0 0.0
          %752 = vmatprep.subr.mxu0 0.0
          %753 = vmatpush2.msra.mxu0 0.0
          %754 = vmatprep.subr.mxu0 0.0
          %755 = vmatpush2.msra.mxu0 0.0
          %756 = vmatprep.mubr.f32.mxu0 0.0
          %757 = vmatmul.mubr.f32.gmra.mxu0 %v678
          %v758 = vpop.f32.mrf.mxu0
          %v759 = vadd.f32 %v659, %v758
          %v760 = vpop.f32.mrf.mxu0
          %761 = vmatprep.mubr.f32.mxu0 0.0
          %762 = vmatmul.mubr.f32.gmra.mxu0 %v681
          %v763 = vpop.f32.mrf.mxu0
          %v764 = vadd.f32 %v664, %v763
          %v765 = vpop.f32.mrf.mxu0
          %766 = vmatprep.mubr.f32.mxu0 0.0
          %767 = vmatmul.mubr.f32.gmra.mxu0 %v684
          %v768 = vpop.f32.mrf.mxu0
          %v769 = vadd.f32 %v669, %v768
          %v770 = vpop.f32.mrf.mxu0
          %771 = vmatprep.mubr.f32.mxu0 0.0
          %772 = vmatmul.mubr.f32.gmra.mxu0 %v687
          %v773 = vpop.f32.mrf.mxu0
          %v774 = vadd.f32 %v674, %v773
          %v775 = vpop.f32.mrf.mxu0
          %776 = vdwg.mxu0
          %v777 = vld [vmem:[%s5] sm:$0x1]
          %v779 = vlaneseq
          %v780 = vshrl.u32 %v779, 7
          %v781 = vsub.s32 0, %v780
          %v782 = vrot.slane %v777, %v781
          %v784 = vadd.f32 %v759, %v782
          %v785 = vadd.f32 %v764, %v782
          %v786 = vadd.f32 %v769, %v782
          %v787 = vadd.f32 %v774, %v782
          %788 = vst [vmem:[%s336] sm:$0xff] %v784
          %789 = vst [vmem:[%s336 + $0x8] sm:$0xff] %v785
          %790 = vst [vmem:[%s336 + $0x10] sm:$0xff] %v786
          %791 = vst [vmem:[%s336 + $0x18] sm:$0xff] %v787
        $region52: #{tpu_custom_call.1} parent=43 // pred_fallthru
          _
        %s792 = sand.u32 %s198, 1
        %s793 = scalar_lea.sflag [#allocation4], %s792
        %s794 = sand.u32 %s198, 1
        %s795 = smul.addr %s794, 32
        %s796 = scalar_lea.vmem [#allocation3], %s795
        // Predicated region
        $region53: #{tpu_custom_call.1} parent=43 // pred_check
          %p797 = pneg %p208
        $region54: #{tpu_custom_call.1} parent=43 // pred_check_branch
          %799 = sbr.rel (%p797) target = $region56
        $region55: #{tpu_custom_call.1} parent=43 // pred_region
          %s800 = smul.u32 4, %s26
          %s802 = ssub.s32 512, 512
          %803 = vsyncadd %s793, %s802
          %s804 = smul.addr %s25, 4
          %s805 = sadd.s32 %s800, %s804
          %s806 = smul.addr %s805, 128
          %s807 = scalar_lea.hbm %s6, %s806
          %s808 = sshll.u32 %s796, 4
          %s809 = int_to_ptr.vmem [resolvable:$true] %s808
          %814 = dma.vmem_to_hbm [thread:$0]  %s809, 512, %s807, %s793, 128, 128, 8
        $region56: #{tpu_custom_call.1} parent=43 // pred_fallthru
          _
      $region44: #{tpu_custom_call.1} parent=5 // pred_fallthru
        _
      %p815 = scmp.le.s32.totalorder 2, %s15
      // Predicated region
      $region57: #{tpu_custom_call.1} parent=5 // pred_check
        %p816 = pneg %p815
      $region58: #{tpu_custom_call.1} parent=5 // pred_check_branch
        %818 = sbr.rel (%p816) target = $region60
      $region59: #{tpu_custom_call.1} parent=5 // pred_region
        %s819 = ssub.s32 %s15, 2
        // Predicated region
        $region61: #{tpu_custom_call.1} parent=59 // pred_check
          %p820 = pneg %p214
        $region62: #{tpu_custom_call.1} parent=59 // pred_check_branch
          %822 = sbr.rel (%p820) target = $region64
        $region63: #{tpu_custom_call.1} parent=59 // pred_region
          %s823 = sand.u32 %s199, 1
          %s824 = scalar_lea.sflag [#allocation4], %s823
          %s825 = sand.u32 %s199, 1
          %s826 = smul.addr %s825, 32
          %s827 = scalar_lea.vmem [#allocation3], %s826
          %828 = dma.done %s824, 512
        $region64: #{tpu_custom_call.1} parent=59 // pred_fallthru
          _
      $region60: #{tpu_custom_call.1} parent=5 // pred_fallthru
        _
    $region6: #{tpu_custom_call.1} parent=1 // loop_footer
      %s19 = sadd.s32 1, %s15
    $region7: #{tpu_custom_call.1} parent=1 // loop_footer_branch
      %14 = sbr.rel target = $region3
    $region8: #{tpu_custom_call.1} parent=1 // loop_exit
      _
    %829 = vsyncpa [#allocation4], 1
    %s830 = scalar_lea.sflag [#allocation4], 1
    %831 = vsyncpa %s830, 1

</llo_original>
